<compile_context>
chip_gen: v5e
topology: v5e:2x2
jax: 0.10.0
libtpu: 0.0.40
codegen_flags: <defaults>
</compile_context>

<pallas_src>
import jax
import jax.numpy as jnp
from jax.experimental import pallas as pl
from jax.experimental.pallas import tpu as pltpu


def _round_up(x, m):
    return ((x + m - 1) // m) * m


# ----------------------------------------------------------------------------- #
# Pallas kernel: TensorFusionNetwork forward for one batch-column tile.
#   x_ref  : (Daug, bb)        transposed [text|graph|num|1|pad] activations
#   wc_ref : (3*dfp, Daug)     stacked expanded condense weights (text/graph/num
#                              planes; per-modality bias folded onto the ones row,
#                              outer-product replication folded in)
#   w1_ref : (post_p, dfp)     post-fusion layer 1 (b1 folded into column 0,
#                              constant-1 hidden unit appended)
#   w2_ref : (post_p, post_p)  post-fusion layer 2 (b2 folded via the 1-unit)
#   w3_ref : (post_p, 1)       final projection column (b3 folded via the 1-unit)
#   out_ref: (1, bb)           lane-dense logits
# ----------------------------------------------------------------------------- #
def tfn_kernel(x_ref, wc_ref, w1_ref, w2_ref, w3_ref, out_ref):
    f32 = jnp.float32
    dfp = wc_ref.shape[0] // 3

    x = x_ref[...]                                                    # (Daug, bb)

    # ONE stacked condense matmul; slices at 128-aligned sublane offsets are free.
    z = jnp.dot(wc_ref[...], x, preferred_element_type=f32)          # (3*dfp, bb)
    fused = z[0:dfp] * z[dfp:2 * dfp] * z[2 * dfp:3 * dfp]           # (dfp, bb) f32
    # padded fused rows [df, dfp) are exactly zero; fused[0, :] == 1 exactly.

    # post-fusion MLP, all biases pre-folded (dropout is identity in eval mode)
    h1 = jnp.maximum(
        jnp.dot(w1_ref[...], fused.astype(w1_ref.dtype),
                preferred_element_type=f32), 0.0)                     # (post_p, bb)
    h2 = jnp.maximum(
        jnp.dot(w2_ref[...], h1.astype(w2_ref.dtype),
                preferred_element_type=f32), 0.0)                     # (post_p, bb)

    # Final projection as a cross-sublane reduction -> one unmasked lane-dense store.
    out_ref[...] = jnp.sum(w3_ref[...] * h2, axis=0, keepdims=True)   # (1, bb)


# ----------------------------------------------------------------------------- #
# Pack PyTorch-style TFN parameters into kernel-ready arrays.
#   Natural params: wt (Dt,ct), bt (1,ct), ..., w1 (df,post), b1 (1,post),
#                   w2 (post,post), b2 (1,post), w3 (post,1), b3 (1,1)
# ----------------------------------------------------------------------------- #
def pack_tfn_params(params, compute_dtype=jnp.bfloat16):
    wt, bt, wg, bg, wn, bn, w1, b1, w2, b2, w3, b3 = params
    f32 = jnp.float32
    Dt, ct = wt.shape
    Dg, cg = wg.shape
    Dn, cn = wn.shape
    ct1, cg1, cn1 = ct + 1, cg + 1, cn + 1
    df = cg1 * cn1 * ct1
    dfp = _round_up(df, 128)
    Dsum = Dt + Dg + Dn
    Daug = _round_up(Dsum + 1, 8)        # [text | graph | num | ones | zero-pad]
    ones_row = Dsum
    post = w1.shape[1]
    post_p = _round_up(post + 1, 8)      # +1 constant-1 hidden unit, pad to sublane

    # fused[b, (g*cn1+n)*ct1 + t] = _g[b,g] * _n[b,n] * _t[b,t]   (torch bmm+view order)
    j = jnp.arange(df)
    t_idx = j % ct1
    n_idx = (j // ct1) % cn1
    g_idx = j // (ct1 * cn1)
    Rt = (jnp.arange(ct1)[:, None] == t_idx[None, :]).astype(f32)    # (ct1, df)
    Rg = (jnp.arange(cg1)[:, None] == g_idx[None, :]).astype(f32)    # (cg1, df)
    Rn = (jnp.arange(cn1)[:, None] == n_idx[None, :]).astype(f32)    # (cn1, df)

    def expand(w, b, R, D):
        # fold "prepend 1":  _x = cat([1, x @ w + b]) == x @ [0|w] + [1|b]
        w_ext = jnp.concatenate([jnp.zeros((D, 1), f32), w], axis=1)
        b_ext = jnp.concatenate([jnp.ones((1, 1), f32), b], axis=1)
        return w_ext @ R, b_ext @ R                                   # (D, df), (1, df)

    wt_exp, bt_exp = expand(wt.astype(f32), bt.astype(f32), Rt, Dt)
    wg_exp, bg_exp = expand(wg.astype(f32), bg.astype(f32), Rg, Dg)
    wn_exp, bn_exp = expand(wn.astype(f32), bn.astype(f32), Rn, Dn)

    def plane(w_exp, b_exp, row0, rows):
        A = jnp.zeros((Daug, dfp), f32)
        A = A.at[row0:row0 + rows, :df].set(w_exp)
        A = A.at[ones_row, :df].set(b_exp[0])      # bias rides the "ones" input row
        return A.T                                 # (dfp, Daug)

    # single stacked condense LHS: one MXU pipeline fill / weight load in the kernel
    wc_flat = jnp.concatenate(
        [plane(wt_exp, bt_exp, 0, Dt),
         plane(wg_exp, bg_exp, Dt, Dg),
         plane(wn_exp, bn_exp, Dt + Dg, Dn)], axis=0)                 # (3*dfp, Daug)

    # layer 1: fold b1 into fused column 0 (fused[0] == 1 identically) and append a
    # constant-1 hidden unit (pre-activation = fused[0] = 1, relu(1) = 1).
    w1_aug = jnp.zeros((post_p, dfp), f32)
    w1_aug = w1_aug.at[:post, :df].set(w1.T.astype(f32))
    w1_aug = w1_aug.at[:post, 0].add(b1[0].astype(f32))
    w1_aug = w1_aug.at[post, 0].set(1.0)

    # layer 2: b2 folded via the constant-1 unit, which also propagates itself.
    w2_aug = jnp.zeros((post_p, post_p), f32)
    w2_aug = w2_aug.at[:post, :post].set(w2.T.astype(f32))
    w2_aug = w2_aug.at[:post, post].set(b2[0].astype(f32))
    w2_aug = w2_aug.at[post, post].set(1.0)

    # layer 3: b3 folded via the constant-1 unit. Kept f32 (used in f32 elementwise).
    w3_aug = jnp.zeros((post_p, 1), f32)
    w3_aug = w3_aug.at[:post, 0].set(w3[:, 0].astype(f32))
    w3_aug = w3_aug.at[post, 0].set(b3[0, 0].astype(f32))

    return (wc_flat.astype(compute_dtype),
            w1_aug.astype(compute_dtype),
            w2_aug.astype(compute_dtype),
            w3_aug)


# ----------------------------------------------------------------------------- #
# Wrapper: build the augmented transposed activation slab and run the kernel.
# ----------------------------------------------------------------------------- #
def tfn_pallas(text, graph, num, packed, *, batch_block=None):
    """TensorFusionNetwork forward via a Pallas TPU kernel. Returns (B,) float32."""
    wc_flat, w1_aug, w2_aug, w3_aug = packed
    cdt = wc_flat.dtype
    f32 = jnp.float32

    B = text.shape[0]
    Daug = wc_flat.shape[1]
    dfp = wc_flat.shape[0] // 3
    post_p = w1_aug.shape[0]
    Dsum1 = text.shape[1] + graph.shape[1] + num.shape[1] + 1
    assert Dsum1 <= Daug

    # Batch-tile selection: per-grid-step overhead dominates at these shapes, so use
    # one big block at small B (best on single-TC v5e/v6e); at large B use 512-wide
    # tiles so grid >= 2 and v7x's two TensorCores both get sharded work.
    if batch_block is None:
        b128 = _round_up(B, 128)
        bb = b128 if b128 <= 512 else 512
    else:
        bb = batch_block
    assert bb % 128 == 0, "batch_block must be a multiple of 128"
    Bp = _round_up(B, bb)

    # Build x_t directly in (feature, batch) layout: only small per-modality
    # transposes, no full-slab (Bp, Daug) -> (Daug, Bp) transpose / HBM round trip.
    x_t = jnp.concatenate(
        [text.T.astype(cdt), graph.T.astype(cdt), num.T.astype(cdt),
         jnp.ones((1, B), cdt)], axis=0)                              # (Dsum+1, B)
    x_t = jnp.pad(x_t, ((0, Daug - Dsum1), (0, Bp - B)))              # (Daug, Bp)

    itemsize = jnp.dtype(cdt).itemsize
    flops = 2 * Bp * (3 * dfp * Daug + post_p * dfp + post_p * post_p + post_p) \
        + 4 * dfp * Bp
    bytes_accessed = (Daug * Bp * itemsize
                      + (wc_flat.size + w1_aug.size + w2_aug.size) * itemsize
                      + w3_aug.size * 4 + Bp * 4)
    cost = pl.CostEstimate(flops=int(flops), transcendentals=0,
                           bytes_accessed=int(bytes_accessed))

    def resident(arr):
        return pl.BlockSpec(arr.shape, lambda i: (0,) * arr.ndim)

    out = pl.pallas_call(
        tfn_kernel,
        out_shape=jax.ShapeDtypeStruct((1, Bp), f32),
        grid_spec=pltpu.PrefetchScalarGridSpec(
            num_scalar_prefetch=0,
            grid=(Bp // bb,),
            in_specs=[
                pl.BlockSpec((Daug, bb), lambda i: (0, i)),           # activations
                resident(wc_flat),
                resident(w1_aug),
                resident(w2_aug),
                resident(w3_aug),
            ],
            out_specs=pl.BlockSpec((1, bb), lambda i: (0, i)),        # lane-dense
        ),
        compiler_params=pltpu.CompilerParams(
            dimension_semantics=("parallel",)),
        cost_estimate=cost,
    )(x_t, wc_flat, w1_aug, w2_aug, w3_aug)
    return out[0, :B]                                                 # (B,)


# ----------------------------------------------------------------------------- #
# Outer model forward (glue): concat graph / numerical features, run TFN kernel.
# ----------------------------------------------------------------------------- #
def text_and_graph_and_num_forward(text_emb, node0, node1, num0, num1, packed,
                                   *, batch_block=None):
    # text_hid  = dropout(text_emb)                    -> identity (eval)
    # graph_hid = dropout(cat([node0, node1], dim=-1)) -> identity (eval)
    graph_hid = jnp.concatenate([node0, node1], axis=-1)
    num_hid = jnp.concatenate([num0, num1], axis=-1)
    return tfn_pallas(text_emb, graph_hid, num_hid, packed,
                      batch_block=batch_block)                        # (B,)


# ----------------------------------------------------------------------------- #
# Deterministic parameter construction (synthetic; no checkpoint loading).
# ----------------------------------------------------------------------------- #
def init_params(key, text_dim, graph_dim, num_dim, ct, cg, cn, post_dim):
    ks = jax.random.split(key, 12)

    def lin_w(k, din, dout):
        return (jax.random.normal(k, (din, dout), jnp.float32)
                * jnp.sqrt(2.0 / (din + dout)))

    def lin_b(k, dout):
        return jax.random.normal(k, (1, dout), jnp.float32) * 0.01

    wt = lin_w(ks[0], text_dim, ct);   bt = lin_b(ks[1], ct)
    wg = lin_w(ks[2], graph_dim, cg);  bg = lin_b(ks[3], cg)
    wn = lin_w(ks[4], num_dim, cn);    bn = lin_b(ks[5], cn)
    df = (cg + 1) * (cn + 1) * (ct + 1)
    w1 = lin_w(ks[6], df, post_dim);        b1 = lin_b(ks[7], post_dim)
    w2 = lin_w(ks[8], post_dim, post_dim);  b2 = lin_b(ks[9], post_dim)
    w3 = lin_w(ks[10], post_dim, 1);        b3 = lin_b(ks[11], 1)
    return (wt, bt, wg, bg, wn, bn, w1, b1, w2, b2, w3, b3)


# ----------------------------------------------------------------------------- #
# Pure-JAX reference reproducing the PyTorch ones-cat / bmm / view semantics.
# ----------------------------------------------------------------------------- #
def tfn_reference(text, graph, num, params):
    wt, bt, wg, bg, wn, bn, w1, b1, w2, b2, w3, b3 = params
    B = text.shape[0]
    ones = jnp.ones((B, 1), jnp.float32)
    _t = jnp.concatenate([ones, text @ wt + bt], axis=1)
    _g = jnp.concatenate([ones, graph @ wg + bg], axis=1)
    _n = jnp.concatenate([ones, num @ wn + bn], axis=1)
    gn = jnp.einsum('bg,bn->bgn', _g, _n).reshape(B, -1)              # bmm + view
    fused = jnp.einsum('bj,bt->bjt', gn, _t).reshape(B, -1)           # bmm + view
    h1 = jax.nn.relu(fused @ w1 + b1)
    h2 = jax.nn.relu(h1 @ w2 + b2)
    return h2 @ w3 + b3                                               # (B, 1)


if __name__ == "__main__":
    B = 256                # single 256-wide tile (grid=1) at this demo size
    TEXT_HIDDEN = 32       # stand-in for BioBERT hidden_size (with_lstm=False)
    NODE_DIM = 8           # GNN node embedding dim  -> graph feature = 2*NODE_DIM
    NUM_FEATURE_DIM = 4    # numerical feature dim   -> num feature   = 2*NUM_FEATURE_DIM
    CT, CG, CN = 4, 4, 4   # condense dims
    POST_DIM = 32          # post_fusion_dim

    key = jax.random.PRNGKey(0)
    k_in, k_par = jax.random.split(key)
    k1, k2, k3, k4, k5 = jax.random.split(k_in, 5)

    text_emb = jax.random.normal(k1, (B, TEXT_HIDDEN), jnp.float32)
    node0 = jax.random.normal(k2, (B, NODE_DIM), jnp.float32)
    node1 = jax.random.normal(k3, (B, NODE_DIM), jnp.float32)
    numerical_features0 = jax.random.normal(k4, (B, NUM_FEATURE_DIM), jnp.float32)
    numerical_features1 = jax.random.normal(k5, (B, NUM_FEATURE_DIM), jnp.float32)

    params = init_params(k_par, TEXT_HIDDEN, 2 * NODE_DIM, 2 * NUM_FEATURE_DIM,
                         CT, CG, CN, POST_DIM)
    packed_bf16 = pack_tfn_params(params, compute_dtype=jnp.bfloat16)  # fast path
    packed_f32 = pack_tfn_params(params, compute_dtype=jnp.float32)    # exact path

    fwd = jax.jit(text_and_graph_and_num_forward, static_argnames=("batch_block",))

    out_bf16 = jax.block_until_ready(
        fwd(text_emb, node0, node1, numerical_features0, numerical_features1,
            packed_bf16))
    out_f32 = jax.block_until_ready(
        fwd(text_emb, node0, node1, numerical_features0, numerical_features1,
            packed_f32))

    # correctness check against a pure-JAX reference with PyTorch semantics
    graph_hid = jnp.concatenate([node0, node1], axis=-1)
    num_hid = jnp.concatenate([numerical_features0, numerical_features1], axis=-1)
    ref = jnp.squeeze(tfn_reference(text_emb, graph_hid, num_hid, params), axis=-1)

    assert out_bf16.shape == (B,), out_bf16.shape
    assert out_f32.shape == (B,), out_f32.shape
    # f32 packing is an exact structural rewrite -> tight tolerance
    assert jnp.allclose(out_f32, ref, rtol=5e-3, atol=5e-3), (out_f32, ref)
    # bf16 matmul operands (f32 accumulation / f32 elementwise) -> looser tolerance
    assert jnp.allclose(out_bf16, ref, rtol=5e-2, atol=5e-2), (out_bf16, ref)
    print("KERNEL_OK")
</pallas_src>

<mosaic_0001>
module attributes {stable_mosaic.version = 11 : i64} {
  func.func @tfn_kernel(%arg0: i32, %arg1: memref<64x256xbf16, #tpu.memory_space<vmem>>, %arg2: memref<384x64xbf16, #tpu.memory_space<vmem>>, %arg3: memref<40x128xbf16, #tpu.memory_space<vmem>>, %arg4: memref<40x40xbf16, #tpu.memory_space<vmem>>, %arg5: memref<40x1xf32, #tpu.memory_space<vmem>>, %arg6: memref<1x256xf32, #tpu.memory_space<vmem>>) attributes {dimension_semantics = [#tpu.dimension_semantics<parallel>], iteration_bounds = array<i64: 1>, scalar_prefetch = 0 : i64, scratch_operands = 0 : i64, tpu.core_type = #tpu.core_type<tc>, window_params = [{transform_indices = @transform_0, window_bounds = array<i64: 64, 256>}, {pipeline_mode = #tpu.pipeline_mode<synchronous>, transform_indices = @transform_1, window_bounds = array<i64: 384, 64>}, {pipeline_mode = #tpu.pipeline_mode<synchronous>, transform_indices = @transform_2, window_bounds = array<i64: 40, 128>}, {pipeline_mode = #tpu.pipeline_mode<synchronous>, transform_indices = @transform_3, window_bounds = array<i64: 40, 40>}, {pipeline_mode = #tpu.pipeline_mode<synchronous>, transform_indices = @transform_4, window_bounds = array<i64: 40, 1>}, {transform_indices = @transform_5, window_bounds = array<i64: 1, 256>}]} {
    %c0 = arith.constant 0 : index
    %c0_0 = arith.constant 0 : index
    %0 = vector.load %arg1[%c0, %c0_0] : memref<64x256xbf16, #tpu.memory_space<vmem>>, vector<64x256xbf16>
    %c0_1 = arith.constant 0 : index
    %c0_2 = arith.constant 0 : index
    %1 = vector.load %arg2[%c0_1, %c0_2] : memref<384x64xbf16, #tpu.memory_space<vmem>>, vector<384x64xbf16>
    %cst = arith.constant dense<0.000000e+00> : vector<384x256xf32>
    %2 = tpu.matmul %1, %0, %cst {dimension_numbers = #tpu.dot_dimension_numbers<[1], [0], [0], [1], [0, 0, 1, 1], [], []>} : vector<384x64xbf16>, vector<64x256xbf16>, vector<384x256xf32> -> vector<384x256xf32>
    %3 = vector.extract_strided_slice %2 {offsets = [0, 0], sizes = [128, 256], strides = [1, 1]} : vector<384x256xf32> to vector<128x256xf32>
    %4 = vector.extract_strided_slice %2 {offsets = [128, 0], sizes = [128, 256], strides = [1, 1]} : vector<384x256xf32> to vector<128x256xf32>
    %5 = arith.mulf %3, %4 : vector<128x256xf32>
    %6 = vector.extract_strided_slice %2 {offsets = [256, 0], sizes = [128, 256], strides = [1, 1]} : vector<384x256xf32> to vector<128x256xf32>
    %7 = arith.mulf %5, %6 : vector<128x256xf32>
    %c0_3 = arith.constant 0 : index
    %c0_4 = arith.constant 0 : index
    %8 = vector.load %arg3[%c0_3, %c0_4] : memref<40x128xbf16, #tpu.memory_space<vmem>>, vector<40x128xbf16>
    %9 = arith.truncf %7 : vector<128x256xf32> to vector<128x256xbf16>
    %cst_5 = arith.constant dense<0.000000e+00> : vector<40x256xf32>
    %10 = tpu.matmul %8, %9, %cst_5 {dimension_numbers = #tpu.dot_dimension_numbers<[1], [0], [0], [1], [0, 0, 1, 1], [], []>} : vector<40x128xbf16>, vector<128x256xbf16>, vector<40x256xf32> -> vector<40x256xf32>
    %cst_6 = arith.constant 0.000000e+00 : f32
    %11 = vector.broadcast %cst_6 : f32 to vector<40x256xf32>
    %12 = arith.maximumf %10, %11 : vector<40x256xf32>
    %c0_7 = arith.constant 0 : index
    %c0_8 = arith.constant 0 : index
    %13 = vector.load %arg4[%c0_7, %c0_8] : memref<40x40xbf16, #tpu.memory_space<vmem>>, vector<40x40xbf16>
    %14 = arith.truncf %12 : vector<40x256xf32> to vector<40x256xbf16>
    %cst_9 = arith.constant dense<0.000000e+00> : vector<40x256xf32>
    %15 = tpu.matmul %13, %14, %cst_9 {dimension_numbers = #tpu.dot_dimension_numbers<[1], [0], [0], [1], [0, 0, 1, 1], [], []>} : vector<40x40xbf16>, vector<40x256xbf16>, vector<40x256xf32> -> vector<40x256xf32>
    %cst_10 = arith.constant 0.000000e+00 : f32
    %16 = vector.broadcast %cst_10 : f32 to vector<40x256xf32>
    %17 = arith.maximumf %15, %16 : vector<40x256xf32>
    %c0_11 = arith.constant 0 : index
    %c0_12 = arith.constant 0 : index
    %18 = vector.load %arg5[%c0_11, %c0_12] : memref<40x1xf32, #tpu.memory_space<vmem>>, vector<40x1xf32>
    %19 = vector.broadcast %18 : vector<40x1xf32> to vector<40x256xf32>
    %20 = arith.mulf %19, %17 : vector<40x256xf32>
    %cst_13 = arith.constant dense<0.000000e+00> : vector<256xf32>
    %21 = vector.multi_reduction <add>, %20, %cst_13 [0] : vector<40x256xf32> to vector<256xf32>
    %22 = vector.shape_cast %21 : vector<256xf32> to vector<1x256xf32>
    %c0_14 = arith.constant 0 : index
    %c0_15 = arith.constant 0 : index
    %23 = vector.load %arg6[%c0_14, %c0_15] : memref<1x256xf32, #tpu.memory_space<vmem>>, vector<1x256xf32>
    tpu.vector_store %arg6[%c0_14, %c0_15], %22 {strides = array<i32>} : memref<1x256xf32, #tpu.memory_space<vmem>>, vector<1x256xf32>,
    return
  }
  func.func @transform_0(%arg0: i32) -> (i32, i32) {
    %c0_i32 = arith.constant 0 : i32
    %c0_i32_0 = arith.constant 0 : i32
    return %c0_i32, %arg0 : i32, i32
  }
  func.func @transform_1(%arg0: i32) -> (i32, i32) {
    %c0_i32 = arith.constant 0 : i32
    %c0_i32_0 = arith.constant 0 : i32
    %c0_i32_1 = arith.constant 0 : i32
    return %c0_i32, %c0_i32_0 : i32, i32
  }
  func.func @transform_2(%arg0: i32) -> (i32, i32) {
    %c0_i32 = arith.constant 0 : i32
    %c0_i32_0 = arith.constant 0 : i32
    %c0_i32_1 = arith.constant 0 : i32
    return %c0_i32, %c0_i32_0 : i32, i32
  }
  func.func @transform_3(%arg0: i32) -> (i32, i32) {
    %c0_i32 = arith.constant 0 : i32
    %c0_i32_0 = arith.constant 0 : i32
    %c0_i32_1 = arith.constant 0 : i32
    return %c0_i32, %c0_i32_0 : i32, i32
  }
  func.func @transform_4(%arg0: i32) -> (i32, i32) {
    %c0_i32 = arith.constant 0 : i32
    %c0_i32_0 = arith.constant 0 : i32
    %c0_i32_1 = arith.constant 0 : i32
    return %c0_i32, %c0_i32_0 : i32, i32
  }
  func.func @transform_5(%arg0: i32) -> (i32, i32) {
    %c0_i32 = arith.constant 0 : i32
    %c0_i32_0 = arith.constant 0 : i32
    return %c0_i32, %arg0 : i32, i32
  }
}

</mosaic_0001>

<llo_original>
// kernel: text_and_graph_and_num_forward.1
$region0: #{text_and_graph_and_num_forward.1}
  #allocation0 [shape = 'u32[]', space=smem, size = 0x4, offset = 0x4, fixed_abs, tag = 'smem constant byte address 0x4 - core index']
  #allocation1 [shape = 'u32[72,128]{1,0:T(1,128)}', space=vmem, size = 0x9000, scoped, tag = 'internal scratch']
  %s0 = inlined_call_operand.vmem [shape: bf16[64,256], index: 0, kind: input, shape index: {}]
  %s1 = inlined_call_operand.vmem [shape: bf16[384,64], index: 1, kind: input, shape index: {}]
  %s2 = inlined_call_operand.vmem [shape: bf16[40,128], index: 2, kind: input, shape index: {}]
  %s3 = inlined_call_operand.vmem [shape: bf16[40,40], index: 3, kind: input, shape index: {}]
  %s4 = inlined_call_operand.vmem [shape: f32[40,1], index: 4, kind: input, shape index: {}]
  %s5 = inlined_call_operand.hbm [shape: f32[1,256], index: 5, kind: output, shape index: {}]
  %s6 = sld [smem:[#allocation0]]
  $region30: #{text_and_graph_and_num_forward.1} parent=0
    _
  %s8 = ssub.s32 1, %s6
  %s9 = scalar_select 0, %s8, %s6
  $region1: #{text_and_graph_and_num_forward.1} parent=0
    #allocation2 [shape = 'u8[1024]{0}', space=vmem, size = 0x400, scoped, tag = 'output window, operand 0, single buffered']
    #allocation3 [shape = 's32[1]{0}', space=sflag, size = 0x4, scoped, tag = 'scoped memory for text_and_graph_and_num_forward.1']
    %10 = vsyncpa [#allocation3], 0
    // Predicated region
    $region2: #{text_and_graph_and_num_forward.1} parent=1 // pred_check
      _
    $region3: #{text_and_graph_and_num_forward.1} parent=1 // pred_check_branch
      %12 = sbr.rel (0) target = $region5
    $region4: #{text_and_graph_and_num_forward.1} parent=1 // pred_region
      _
    $region5: #{text_and_graph_and_num_forward.1} parent=1 // pred_fallthru
      _
    // Predicated region
    $region6: #{text_and_graph_and_num_forward.1} parent=1 // pred_check
      _
    $region7: #{text_and_graph_and_num_forward.1} parent=1 // pred_check_branch
      %14 = sbr.rel (0) target = $region9
    $region8: #{text_and_graph_and_num_forward.1} parent=1 // pred_region
      _
    $region9: #{text_and_graph_and_num_forward.1} parent=1 // pred_fallthru
      _
    // Predicated region
    $region10: #{text_and_graph_and_num_forward.1} parent=1 // pred_check
      _
    $region11: #{text_and_graph_and_num_forward.1} parent=1 // pred_check_branch
      %16 = sbr.rel (0) target = $region13
    $region12: #{text_and_graph_and_num_forward.1} parent=1 // pred_region
      _
    $region13: #{text_and_graph_and_num_forward.1} parent=1 // pred_fallthru
      _
    // Predicated region
    $region14: #{text_and_graph_and_num_forward.1} parent=1 // pred_check
      _
    $region15: #{text_and_graph_and_num_forward.1} parent=1 // pred_check_branch
      %18 = sbr.rel (0) target = $region17
    $region16: #{text_and_graph_and_num_forward.1} parent=1 // pred_region
      _
    $region17: #{text_and_graph_and_num_forward.1} parent=1 // pred_fallthru
      _
    // Predicated region
    $region18: #{text_and_graph_and_num_forward.1} parent=1 // pred_check
      _
    $region19: #{text_and_graph_and_num_forward.1} parent=1 // pred_check_branch
      %20 = sbr.rel (0) target = $region21
    $region20: #{text_and_graph_and_num_forward.1} parent=1 // pred_region
      _
    $region21: #{text_and_graph_and_num_forward.1} parent=1 // pred_fallthru
      _
    %v22 = vld [vmem:[%s0] sm:$0xff]
    %v23 = vld [vmem:[%s0 + $0x8] sm:$0xff]
    %v24 = vld [vmem:[%s0 + $0x10] sm:$0xff]
    %v25 = vld [vmem:[%s0 + $0x18] sm:$0xff]
    %v26 = vld [vmem:[%s0 + $0x20] sm:$0xff]
    %v27 = vld [vmem:[%s0 + $0x28] sm:$0xff]
    %v28 = vld [vmem:[%s0 + $0x30] sm:$0xff]
    %v29 = vld [vmem:[%s0 + $0x38] sm:$0xff]
    %v30 = vld [vmem:[%s1] sm:$0xf]
    %v31 = vld [vmem:[%s1 + $0x4] sm:$0xf]
    %v32 = vld [vmem:[%s1 + $0x8] sm:$0xf]
    %v33 = vld [vmem:[%s1 + $0xc] sm:$0xf]
    %v34 = vld [vmem:[%s1 + $0x10] sm:$0xf]
    %v35 = vld [vmem:[%s1 + $0x14] sm:$0xf]
    %v36 = vld [vmem:[%s1 + $0x18] sm:$0xf]
    %v37 = vld [vmem:[%s1 + $0x1c] sm:$0xf]
    %v38 = vld [vmem:[%s1 + $0x20] sm:$0xf]
    %v39 = vld [vmem:[%s1 + $0x24] sm:$0xf]
    %v40 = vld [vmem:[%s1 + $0x28] sm:$0xf]
    %v41 = vld [vmem:[%s1 + $0x2c] sm:$0xf]
    %v42 = vld [vmem:[%s1 + $0x30] sm:$0xf]
    %v43 = vld [vmem:[%s1 + $0x34] sm:$0xf]
    %v44 = vld [vmem:[%s1 + $0x38] sm:$0xf]
    %v45 = vld [vmem:[%s1 + $0x3c] sm:$0xf]
    %v46 = vld [vmem:[%s1 + $0x40] sm:$0xf]
    %v47 = vld [vmem:[%s1 + $0x44] sm:$0xf]
    %v48 = vld [vmem:[%s1 + $0x48] sm:$0xf]
    %v49 = vld [vmem:[%s1 + $0x4c] sm:$0xf]
    %v50 = vld [vmem:[%s1 + $0x50] sm:$0xf]
    %v51 = vld [vmem:[%s1 + $0x54] sm:$0xf]
    %v52 = vld [vmem:[%s1 + $0x58] sm:$0xf]
    %v53 = vld [vmem:[%s1 + $0x5c] sm:$0xf]
    %v54 = vld [vmem:[%s1 + $0x60] sm:$0xf]
    %v55 = vld [vmem:[%s1 + $0x64] sm:$0xf]
    %v56 = vld [vmem:[%s1 + $0x68] sm:$0xf]
    %v57 = vld [vmem:[%s1 + $0x6c] sm:$0xf]
    %v58 = vld [vmem:[%s1 + $0x70] sm:$0xf]
    %v59 = vld [vmem:[%s1 + $0x74] sm:$0xf]
    %v60 = vld [vmem:[%s1 + $0x78] sm:$0xf]
    %v61 = vld [vmem:[%s1 + $0x7c] sm:$0xf]
    %v62 = vld [vmem:[%s1 + $0x80] sm:$0xf]
    %v63 = vld [vmem:[%s1 + $0x84] sm:$0xf]
    %v64 = vld [vmem:[%s1 + $0x88] sm:$0xf]
    %v65 = vld [vmem:[%s1 + $0x8c] sm:$0xf]
    %v66 = vld [vmem:[%s1 + $0x90] sm:$0xf]
    %v67 = vld [vmem:[%s1 + $0x94] sm:$0xf]
    %v68 = vld [vmem:[%s1 + $0x98] sm:$0xf]
    %v69 = vld [vmem:[%s1 + $0x9c] sm:$0xf]
    %v70 = vld [vmem:[%s1 + $0xa0] sm:$0xf]
    %v71 = vld [vmem:[%s1 + $0xa4] sm:$0xf]
    %v72 = vld [vmem:[%s1 + $0xa8] sm:$0xf]
    %v73 = vld [vmem:[%s1 + $0xac] sm:$0xf]
    %v74 = vld [vmem:[%s1 + $0xb0] sm:$0xf]
    %v75 = vld [vmem:[%s1 + $0xb4] sm:$0xf]
    %v76 = vld [vmem:[%s1 + $0xb8] sm:$0xf]
    %v77 = vld [vmem:[%s1 + $0xbc] sm:$0xf]
    %v126 = vunpack.c.l.b16 %v30
    %v127 = vunpack.c.l.b16 %v31
    %v128 = vunpack.c.l.b16 %v32
    %v129 = vunpack.c.l.b16 %v33
    %v130 = vunpack.c.l.b16 %v34
    %v131 = vunpack.c.l.b16 %v35
    %v132 = vunpack.c.l.b16 %v36
    %v133 = vunpack.c.l.b16 %v37
    %v134 = vunpack.c.l.b16 %v38
    %v135 = vunpack.c.l.b16 %v39
    %v136 = vunpack.c.l.b16 %v40
    %v137 = vunpack.c.l.b16 %v41
    %v138 = vunpack.c.l.b16 %v42
    %v139 = vunpack.c.l.b16 %v43
    %v140 = vunpack.c.l.b16 %v44
    %v141 = vunpack.c.l.b16 %v45
    %v142 = vunpack.c.l.b16 %v46
    %v143 = vunpack.c.l.b16 %v47
    %v144 = vunpack.c.l.b16 %v48
    %v145 = vunpack.c.l.b16 %v49
    %v146 = vunpack.c.l.b16 %v50
    %v147 = vunpack.c.l.b16 %v51
    %v148 = vunpack.c.l.b16 %v52
    %v149 = vunpack.c.l.b16 %v53
    %v150 = vunpack.c.l.b16 %v54
    %v151 = vunpack.c.l.b16 %v55
    %v152 = vunpack.c.l.b16 %v56
    %v153 = vunpack.c.l.b16 %v57
    %v154 = vunpack.c.l.b16 %v58
    %v155 = vunpack.c.l.b16 %v59
    %v156 = vunpack.c.l.b16 %v60
    %v157 = vunpack.c.l.b16 %v61
    %v158 = vunpack.c.l.b16 %v62
    %v159 = vunpack.c.l.b16 %v63
    %v160 = vunpack.c.l.b16 %v64
    %v161 = vunpack.c.l.b16 %v65
    %v162 = vunpack.c.l.b16 %v66
    %v163 = vunpack.c.l.b16 %v67
    %v164 = vunpack.c.l.b16 %v68
    %v165 = vunpack.c.l.b16 %v69
    %v166 = vunpack.c.l.b16 %v70
    %v167 = vunpack.c.l.b16 %v71
    %v168 = vunpack.c.l.b16 %v72
    %v169 = vunpack.c.l.b16 %v73
    %v170 = vunpack.c.l.b16 %v74
    %v171 = vunpack.c.l.b16 %v75
    %v172 = vunpack.c.l.b16 %v76
    %v173 = vunpack.c.l.b16 %v77
    %v174 = vpack.c.b16 %v127, %v126
    %v175 = vpack.c.b16 %v129, %v128
    %v176 = vpack.c.b16 %v131, %v130
    %v177 = vpack.c.b16 %v133, %v132
    %v178 = vpack.c.b16 %v135, %v134
    %v179 = vpack.c.b16 %v137, %v136
    %v180 = vpack.c.b16 %v139, %v138
    %v181 = vpack.c.b16 %v141, %v140
    %v182 = vpack.c.b16 %v143, %v142
    %v183 = vpack.c.b16 %v145, %v144
    %v184 = vpack.c.b16 %v147, %v146
    %v185 = vpack.c.b16 %v149, %v148
    %v186 = vpack.c.b16 %v151, %v150
    %v187 = vpack.c.b16 %v153, %v152
    %v188 = vpack.c.b16 %v155, %v154
    %v189 = vpack.c.b16 %v157, %v156
    %v190 = vpack.c.b16 %v159, %v158
    %v191 = vpack.c.b16 %v161, %v160
    %v192 = vpack.c.b16 %v163, %v162
    %v193 = vpack.c.b16 %v165, %v164
    %v194 = vpack.c.b16 %v167, %v166
    %v195 = vpack.c.b16 %v169, %v168
    %v196 = vpack.c.b16 %v171, %v170
    %v197 = vpack.c.b16 %v173, %v172
    %v206 = vunpack.c.l.b16 %v22
    %v207 = vunpack.c.h.b16 %v22
    %v208 = vunpack.c.l.b16 %v23
    %v209 = vunpack.c.h.b16 %v23
    %v210 = vunpack.c.l.b16 %v24
    %v211 = vunpack.c.h.b16 %v24
    %v212 = vunpack.c.l.b16 %v25
    %v213 = vunpack.c.h.b16 %v25
    %v214 = vunpack.c.l.b16 %v26
    %v215 = vunpack.c.h.b16 %v26
    %v216 = vunpack.c.l.b16 %v27
    %v217 = vunpack.c.h.b16 %v27
    %v218 = vunpack.c.l.b16 %v28
    %v219 = vunpack.c.h.b16 %v28
    %v220 = vunpack.c.l.b16 %v29
    %v221 = vunpack.c.h.b16 %v29
    %v222 = vpack.c.b16 %v208, %v206
    %v223 = vpack.c.b16 %v209, %v207
    %v224 = vpack.c.b16 %v212, %v210
    %v225 = vpack.c.b16 %v213, %v211
    %v226 = vpack.c.b16 %v216, %v214
    %v227 = vpack.c.b16 %v217, %v215
    %v228 = vpack.c.b16 %v220, %v218
    %v229 = vpack.c.b16 %v221, %v219
    %vm238 = vcmask 523264
    %v240 = vsel %vm238, %v174, 0
    %v243 = vsel %vm238, %v175, 0
    %v246 = vsel %vm238, %v176, 0
    %v249 = vsel %vm238, %v177, 0
    %v252 = vsel %vm238, %v178, 0
    %v255 = vsel %vm238, %v179, 0
    %v258 = vsel %vm238, %v180, 0
    %v261 = vsel %vm238, %v181, 0
    %v264 = vsel %vm238, %v182, 0
    %v267 = vsel %vm238, %v183, 0
    %v270 = vsel %vm238, %v184, 0
    %v273 = vsel %vm238, %v185, 0
    %v276 = vsel %vm238, %v186, 0
    %v279 = vsel %vm238, %v187, 0
    %v282 = vsel %vm238, %v188, 0
    %v285 = vsel %vm238, %v189, 0
    %v288 = vsel %vm238, %v190, 0
    %v291 = vsel %vm238, %v191, 0
    %v294 = vsel %vm238, %v192, 0
    %v297 = vsel %vm238, %v193, 0
    %v300 = vsel %vm238, %v194, 0
    %v303 = vsel %vm238, %v195, 0
    %v306 = vsel %vm238, %v196, 0
    %v309 = vsel %vm238, %v197, 0
    %311 = vmatpush.bf16.msra.mxu0 0
    %312 = vmatpush.bf16.msra.mxu0 0
    %313 = vmatpush.bf16.msra.mxu0 0
    %314 = vmatpush.bf16.msra.mxu0 0
    %315 = vmatpush.bf16.msra.mxu0 %v228
    %316 = vmatpush.bf16.msra.mxu0 %v226
    %317 = vmatpush.bf16.msra.mxu0 %v224
    %318 = vmatpush.bf16.msra.mxu0 %v222
    %319 = vmatmul.bf16.gmra.mxu0 %v240
    %v320 = vpop.f32.mrf.mxu0
    %v321 = vadd.f32 0.0, %v320
    %v322 = vpop.f32.mrf.mxu0
    %v323 = vadd.f32 0.0, %v322
    %324 = vmatmul.bf16.gmra.mxu0 %v243
    %v325 = vpop.f32.mrf.mxu0
    %v326 = vadd.f32 0.0, %v325
    %v327 = vpop.f32.mrf.mxu0
    %v328 = vadd.f32 0.0, %v327
    %329 = vmatmul.bf16.gmra.mxu0 %v246
    %v330 = vpop.f32.mrf.mxu0
    %v331 = vadd.f32 0.0, %v330
    %v332 = vpop.f32.mrf.mxu0
    %v333 = vadd.f32 0.0, %v332
    %334 = vmatmul.bf16.gmra.mxu0 %v249
    %v335 = vpop.f32.mrf.mxu0
    %v336 = vadd.f32 0.0, %v335
    %v337 = vpop.f32.mrf.mxu0
    %v338 = vadd.f32 0.0, %v337
    %339 = vmatmul.bf16.gmra.mxu0 %v252
    %v340 = vpop.f32.mrf.mxu0
    %v341 = vadd.f32 0.0, %v340
    %v342 = vpop.f32.mrf.mxu0
    %v343 = vadd.f32 0.0, %v342
    %344 = vmatmul.bf16.gmra.mxu0 %v255
    %v345 = vpop.f32.mrf.mxu0
    %v346 = vadd.f32 0.0, %v345
    %v347 = vpop.f32.mrf.mxu0
    %v348 = vadd.f32 0.0, %v347
    %349 = vmatmul.bf16.gmra.mxu0 %v258
    %v350 = vpop.f32.mrf.mxu0
    %v351 = vadd.f32 0.0, %v350
    %v352 = vpop.f32.mrf.mxu0
    %v353 = vadd.f32 0.0, %v352
    %354 = vmatmul.bf16.gmra.mxu0 %v261
    %v355 = vpop.f32.mrf.mxu0
    %v356 = vadd.f32 0.0, %v355
    %v357 = vpop.f32.mrf.mxu0
    %v358 = vadd.f32 0.0, %v357
    %359 = vmatmul.bf16.gmra.mxu0 %v264
    %v360 = vpop.f32.mrf.mxu0
    %v361 = vadd.f32 0.0, %v360
    %v362 = vpop.f32.mrf.mxu0
    %v363 = vadd.f32 0.0, %v362
    %364 = vmatmul.bf16.gmra.mxu0 %v267
    %v365 = vpop.f32.mrf.mxu0
    %v366 = vadd.f32 0.0, %v365
    %v367 = vpop.f32.mrf.mxu0
    %v368 = vadd.f32 0.0, %v367
    %369 = vmatmul.bf16.gmra.mxu0 %v270
    %v370 = vpop.f32.mrf.mxu0
    %v371 = vadd.f32 0.0, %v370
    %v372 = vpop.f32.mrf.mxu0
    %v373 = vadd.f32 0.0, %v372
    %374 = vmatmul.bf16.gmra.mxu0 %v273
    %v375 = vpop.f32.mrf.mxu0
    %v376 = vadd.f32 0.0, %v375
    %v377 = vpop.f32.mrf.mxu0
    %v378 = vadd.f32 0.0, %v377
    %379 = vmatmul.bf16.gmra.mxu0 %v276
    %v380 = vpop.f32.mrf.mxu0
    %v381 = vadd.f32 0.0, %v380
    %v382 = vpop.f32.mrf.mxu0
    %v383 = vadd.f32 0.0, %v382
    %384 = vmatmul.bf16.gmra.mxu0 %v279
    %v385 = vpop.f32.mrf.mxu0
    %v386 = vadd.f32 0.0, %v385
    %v387 = vpop.f32.mrf.mxu0
    %v388 = vadd.f32 0.0, %v387
    %389 = vmatmul.bf16.gmra.mxu0 %v282
    %v390 = vpop.f32.mrf.mxu0
    %v391 = vadd.f32 0.0, %v390
    %v392 = vpop.f32.mrf.mxu0
    %v393 = vadd.f32 0.0, %v392
    %394 = vmatmul.bf16.gmra.mxu0 %v285
    %v395 = vpop.f32.mrf.mxu0
    %v396 = vadd.f32 0.0, %v395
    %v397 = vpop.f32.mrf.mxu0
    %v398 = vadd.f32 0.0, %v397
    %399 = vmatmul.bf16.gmra.mxu0 %v288
    %v400 = vpop.f32.mrf.mxu0
    %v401 = vadd.f32 0.0, %v400
    %v402 = vpop.f32.mrf.mxu0
    %v403 = vadd.f32 0.0, %v402
    %404 = vmatmul.bf16.gmra.mxu0 %v291
    %v405 = vpop.f32.mrf.mxu0
    %v406 = vadd.f32 0.0, %v405
    %v407 = vpop.f32.mrf.mxu0
    %v408 = vadd.f32 0.0, %v407
    %409 = vmatmul.bf16.gmra.mxu0 %v294
    %v410 = vpop.f32.mrf.mxu0
    %v411 = vadd.f32 0.0, %v410
    %v412 = vpop.f32.mrf.mxu0
    %v413 = vadd.f32 0.0, %v412
    %414 = vmatmul.bf16.gmra.mxu0 %v297
    %v415 = vpop.f32.mrf.mxu0
    %v416 = vadd.f32 0.0, %v415
    %v417 = vpop.f32.mrf.mxu0
    %v418 = vadd.f32 0.0, %v417
    %419 = vmatmul.bf16.gmra.mxu0 %v300
    %v420 = vpop.f32.mrf.mxu0
    %v421 = vadd.f32 0.0, %v420
    %v422 = vpop.f32.mrf.mxu0
    %v423 = vadd.f32 0.0, %v422
    %424 = vmatmul.bf16.gmra.mxu0 %v303
    %v425 = vpop.f32.mrf.mxu0
    %v426 = vadd.f32 0.0, %v425
    %v427 = vpop.f32.mrf.mxu0
    %v428 = vadd.f32 0.0, %v427
    %429 = vmatmul.bf16.gmra.mxu0 %v306
    %v430 = vpop.f32.mrf.mxu0
    %v431 = vadd.f32 0.0, %v430
    %v432 = vpop.f32.mrf.mxu0
    %v433 = vadd.f32 0.0, %v432
    %434 = vmatmul.bf16.gmra.mxu0 %v309
    %v435 = vpop.f32.mrf.mxu0
    %v436 = vadd.f32 0.0, %v435
    %v437 = vpop.f32.mrf.mxu0
    %v438 = vadd.f32 0.0, %v437
    %439 = vdwg.mxu0
    %440 = vmatpush.bf16.msra.mxu0 0
    %441 = vmatpush.bf16.msra.mxu0 0
    %442 = vmatpush.bf16.msra.mxu0 0
    %443 = vmatpush.bf16.msra.mxu0 0
    %444 = vmatpush.bf16.msra.mxu0 %v229
    %445 = vmatpush.bf16.msra.mxu0 %v227
    %446 = vmatpush.bf16.msra.mxu0 %v225
    %447 = vmatpush.bf16.msra.mxu0 %v223
    %448 = vmatmul.bf16.gmra.mxu0 %v240
    %v449 = vpop.f32.mrf.mxu0
    %v450 = vadd.f32 0.0, %v449
    %v451 = vpop.f32.mrf.mxu0
    %v452 = vadd.f32 0.0, %v451
    %453 = vmatmul.bf16.gmra.mxu0 %v243
    %v454 = vpop.f32.mrf.mxu0
    %v455 = vadd.f32 0.0, %v454
    %v456 = vpop.f32.mrf.mxu0
    %v457 = vadd.f32 0.0, %v456
    %458 = vmatmul.bf16.gmra.mxu0 %v246
    %v459 = vpop.f32.mrf.mxu0
    %v460 = vadd.f32 0.0, %v459
    %v461 = vpop.f32.mrf.mxu0
    %v462 = vadd.f32 0.0, %v461
    %463 = vmatmul.bf16.gmra.mxu0 %v249
    %v464 = vpop.f32.mrf.mxu0
    %v465 = vadd.f32 0.0, %v464
    %v466 = vpop.f32.mrf.mxu0
    %v467 = vadd.f32 0.0, %v466
    %468 = vmatmul.bf16.gmra.mxu0 %v252
    %v469 = vpop.f32.mrf.mxu0
    %v470 = vadd.f32 0.0, %v469
    %v471 = vpop.f32.mrf.mxu0
    %v472 = vadd.f32 0.0, %v471
    %473 = vmatmul.bf16.gmra.mxu0 %v255
    %v474 = vpop.f32.mrf.mxu0
    %v475 = vadd.f32 0.0, %v474
    %v476 = vpop.f32.mrf.mxu0
    %v477 = vadd.f32 0.0, %v476
    %478 = vmatmul.bf16.gmra.mxu0 %v258
    %v479 = vpop.f32.mrf.mxu0
    %v480 = vadd.f32 0.0, %v479
    %v481 = vpop.f32.mrf.mxu0
    %v482 = vadd.f32 0.0, %v481
    %483 = vmatmul.bf16.gmra.mxu0 %v261
    %v484 = vpop.f32.mrf.mxu0
    %v485 = vadd.f32 0.0, %v484
    %v486 = vpop.f32.mrf.mxu0
    %v487 = vadd.f32 0.0, %v486
    %488 = vmatmul.bf16.gmra.mxu0 %v264
    %v489 = vpop.f32.mrf.mxu0
    %v490 = vadd.f32 0.0, %v489
    %v491 = vpop.f32.mrf.mxu0
    %v492 = vadd.f32 0.0, %v491
    %493 = vmatmul.bf16.gmra.mxu0 %v267
    %v494 = vpop.f32.mrf.mxu0
    %v495 = vadd.f32 0.0, %v494
    %v496 = vpop.f32.mrf.mxu0
    %v497 = vadd.f32 0.0, %v496
    %498 = vmatmul.bf16.gmra.mxu0 %v270
    %v499 = vpop.f32.mrf.mxu0
    %v500 = vadd.f32 0.0, %v499
    %v501 = vpop.f32.mrf.mxu0
    %v502 = vadd.f32 0.0, %v501
    %503 = vmatmul.bf16.gmra.mxu0 %v273
    %v504 = vpop.f32.mrf.mxu0
    %v505 = vadd.f32 0.0, %v504
    %v506 = vpop.f32.mrf.mxu0
    %v507 = vadd.f32 0.0, %v506
    %508 = vmatmul.bf16.gmra.mxu0 %v276
    %v509 = vpop.f32.mrf.mxu0
    %v510 = vadd.f32 0.0, %v509
    %v511 = vpop.f32.mrf.mxu0
    %v512 = vadd.f32 0.0, %v511
    %513 = vmatmul.bf16.gmra.mxu0 %v279
    %v514 = vpop.f32.mrf.mxu0
    %v515 = vadd.f32 0.0, %v514
    %v516 = vpop.f32.mrf.mxu0
    %v517 = vadd.f32 0.0, %v516
    %518 = vmatmul.bf16.gmra.mxu0 %v282
    %v519 = vpop.f32.mrf.mxu0
    %v520 = vadd.f32 0.0, %v519
    %v521 = vpop.f32.mrf.mxu0
    %v522 = vadd.f32 0.0, %v521
    %523 = vmatmul.bf16.gmra.mxu0 %v285
    %v524 = vpop.f32.mrf.mxu0
    %v525 = vadd.f32 0.0, %v524
    %v526 = vpop.f32.mrf.mxu0
    %v527 = vadd.f32 0.0, %v526
    %528 = vmatmul.bf16.gmra.mxu0 %v288
    %v529 = vpop.f32.mrf.mxu0
    %v530 = vadd.f32 0.0, %v529
    %v531 = vpop.f32.mrf.mxu0
    %v532 = vadd.f32 0.0, %v531
    %533 = vmatmul.bf16.gmra.mxu0 %v291
    %v534 = vpop.f32.mrf.mxu0
    %v535 = vadd.f32 0.0, %v534
    %v536 = vpop.f32.mrf.mxu0
    %v537 = vadd.f32 0.0, %v536
    %538 = vmatmul.bf16.gmra.mxu0 %v294
    %v539 = vpop.f32.mrf.mxu0
    %v540 = vadd.f32 0.0, %v539
    %v541 = vpop.f32.mrf.mxu0
    %v542 = vadd.f32 0.0, %v541
    %543 = vmatmul.bf16.gmra.mxu0 %v297
    %v544 = vpop.f32.mrf.mxu0
    %v545 = vadd.f32 0.0, %v544
    %v546 = vpop.f32.mrf.mxu0
    %v547 = vadd.f32 0.0, %v546
    %548 = vmatmul.bf16.gmra.mxu0 %v300
    %v549 = vpop.f32.mrf.mxu0
    %v550 = vadd.f32 0.0, %v549
    %v551 = vpop.f32.mrf.mxu0
    %v552 = vadd.f32 0.0, %v551
    %553 = vmatmul.bf16.gmra.mxu0 %v303
    %v554 = vpop.f32.mrf.mxu0
    %v555 = vadd.f32 0.0, %v554
    %v556 = vpop.f32.mrf.mxu0
    %v557 = vadd.f32 0.0, %v556
    %558 = vmatmul.bf16.gmra.mxu0 %v306
    %v559 = vpop.f32.mrf.mxu0
    %v560 = vadd.f32 0.0, %v559
    %v561 = vpop.f32.mrf.mxu0
    %v562 = vadd.f32 0.0, %v561
    %563 = vmatmul.bf16.gmra.mxu0 %v309
    %v564 = vpop.f32.mrf.mxu0
    %v565 = vadd.f32 0.0, %v564
    %v566 = vpop.f32.mrf.mxu0
    %v567 = vadd.f32 0.0, %v566
    %568 = vdwg.mxu0
    %v569 = vmul.f32 %v321, %v361
    %v570 = vmul.f32 %v450, %v490
    %v571 = vmul.f32 %v323, %v363
    %v572 = vmul.f32 %v452, %v492
    %v573 = vmul.f32 %v326, %v366
    %v574 = vmul.f32 %v455, %v495
    %v575 = vmul.f32 %v328, %v368
    %v576 = vmul.f32 %v457, %v497
    %v577 = vmul.f32 %v331, %v371
    %v578 = vmul.f32 %v460, %v500
    %v579 = vmul.f32 %v333, %v373
    %v580 = vmul.f32 %v462, %v502
    %v581 = vmul.f32 %v336, %v376
    %v582 = vmul.f32 %v465, %v505
    %v583 = vmul.f32 %v338, %v378
    %v584 = vmul.f32 %v467, %v507
    %v585 = vmul.f32 %v341, %v381
    %v586 = vmul.f32 %v470, %v510
    %v587 = vmul.f32 %v343, %v383
    %v588 = vmul.f32 %v472, %v512
    %v589 = vmul.f32 %v346, %v386
    %v590 = vmul.f32 %v475, %v515
    %v591 = vmul.f32 %v348, %v388
    %v592 = vmul.f32 %v477, %v517
    %v593 = vmul.f32 %v351, %v391
    %v594 = vmul.f32 %v480, %v520
    %v595 = vmul.f32 %v353, %v393
    %v596 = vmul.f32 %v482, %v522
    %v597 = vmul.f32 %v356, %v396
    %v598 = vmul.f32 %v485, %v525
    %v599 = vmul.f32 %v358, %v398
    %v600 = vmul.f32 %v487, %v527
    %v601 = vmul.f32 %v569, %v401
    %v602 = vmul.f32 %v570, %v530
    %v603 = vmul.f32 %v571, %v403
    %v604 = vmul.f32 %v572, %v532
    %v605 = vmul.f32 %v573, %v406
    %v606 = vmul.f32 %v574, %v535
    %v607 = vmul.f32 %v575, %v408
    %v608 = vmul.f32 %v576, %v537
    %v609 = vmul.f32 %v577, %v411
    %v610 = vmul.f32 %v578, %v540
    %v611 = vmul.f32 %v579, %v413
    %v612 = vmul.f32 %v580, %v542
    %v613 = vmul.f32 %v581, %v416
    %v614 = vmul.f32 %v582, %v545
    %v615 = vmul.f32 %v583, %v418
    %v616 = vmul.f32 %v584, %v547
    %v617 = vmul.f32 %v585, %v421
    %v618 = vmul.f32 %v586, %v550
    %v619 = vmul.f32 %v587, %v423
    %v620 = vmul.f32 %v588, %v552
    %v621 = vmul.f32 %v589, %v426
    %v622 = vmul.f32 %v590, %v555
    %v623 = vmul.f32 %v591, %v428
    %v624 = vmul.f32 %v592, %v557
    %v625 = vmul.f32 %v593, %v431
    %v626 = vmul.f32 %v594, %v560
    %v627 = vmul.f32 %v595, %v433
    %v628 = vmul.f32 %v596, %v562
    %v629 = vmul.f32 %v597, %v436
    %v630 = vmul.f32 %v598, %v565
    %v631 = vmul.f32 %v599, %v438
    %v632 = vmul.f32 %v600, %v567
    %v633 = vld [vmem:[%s2] sm:$0xf]
    %v634 = vld [vmem:[%s2 + $0x4] sm:$0xf]
    %v635 = vld [vmem:[%s2 + $0x8] sm:$0xf]
    %v636 = vld [vmem:[%s2 + $0xc] sm:$0xf]
    %v637 = vld [vmem:[%s2 + $0x10] sm:$0xf]
    %v638 = vpack.c.bf16 %v603, %v601
    %v639 = vpack.c.bf16 %v604, %v602
    %v640 = vpack.c.bf16 %v607, %v605
    %v641 = vpack.c.bf16 %v608, %v606
    %v642 = vpack.c.bf16 %v611, %v609
    %v643 = vpack.c.bf16 %v612, %v610
    %v644 = vpack.c.bf16 %v615, %v613
    %v645 = vpack.c.bf16 %v616, %v614
    %v646 = vpack.c.bf16 %v619, %v617
    %v647 = vpack.c.bf16 %v620, %v618
    %v648 = vpack.c.bf16 %v623, %v621
    %v649 = vpack.c.bf16 %v624, %v622
    %v650 = vpack.c.bf16 %v627, %v625
    %v651 = vpack.c.bf16 %v628, %v626
    %v652 = vpack.c.bf16 %v631, %v629
    %v653 = vpack.c.bf16 %v632, %v630
    %v659 = vunpack.c.l.b16 %v633
    %v660 = vunpack.c.l.b16 %v634
    %v661 = vunpack.c.l.b16 %v635
    %v662 = vunpack.c.l.b16 %v636
    %v663 = vunpack.c.l.b16 %v637
    %v664 = vpack.c.b16 %v660, %v659
    %v665 = vpack.c.b16 %v662, %v661
    %v666 = vpack.c.b16 %v663, %v663
    %670 = vmatpush.bf16.msra.mxu0 %v652
    %671 = vmatpush.bf16.msra.mxu0 %v650
    %672 = vmatpush.bf16.msra.mxu0 %v648
    %673 = vmatpush.bf16.msra.mxu0 %v646
    %674 = vmatpush.bf16.msra.mxu0 %v644
    %675 = vmatpush.bf16.msra.mxu0 %v642
    %676 = vmatpush.bf16.msra.mxu0 %v640
    %677 = vmatpush.bf16.msra.mxu0 %v638
    %678 = vmatmul.bf16.gmra.mxu0 %v664
    %v679 = vpop.f32.mrf.mxu0
    %v680 = vadd.f32 0.0, %v679
    %v681 = vpop.f32.mrf.mxu0
    %v682 = vadd.f32 0.0, %v681
    %683 = vmatmul.bf16.gmra.mxu0 %v665
    %v684 = vpop.f32.mrf.mxu0
    %v685 = vadd.f32 0.0, %v684
    %v686 = vpop.f32.mrf.mxu0
    %v687 = vadd.f32 0.0, %v686
    %688 = vmatmul.bf16.gmra.mxu0 %v666
    %v689 = vpop.f32.mrf.mxu0
    %v690 = vadd.f32 0.0, %v689
    %v691 = vpop.f32.mrf.mxu0
    %692 = vdwg.mxu0
    %693 = vmatpush.bf16.msra.mxu0 %v653
    %694 = vmatpush.bf16.msra.mxu0 %v651
    %695 = vmatpush.bf16.msra.mxu0 %v649
    %696 = vmatpush.bf16.msra.mxu0 %v647
    %697 = vmatpush.bf16.msra.mxu0 %v645
    %698 = vmatpush.bf16.msra.mxu0 %v643
    %699 = vmatpush.bf16.msra.mxu0 %v641
    %700 = vmatpush.bf16.msra.mxu0 %v639
    %701 = vmatmul.bf16.gmra.mxu0 %v664
    %v702 = vpop.f32.mrf.mxu0
    %v703 = vadd.f32 0.0, %v702
    %v704 = vpop.f32.mrf.mxu0
    %v705 = vadd.f32 0.0, %v704
    %706 = vmatmul.bf16.gmra.mxu0 %v665
    %v707 = vpop.f32.mrf.mxu0
    %v708 = vadd.f32 0.0, %v707
    %v709 = vpop.f32.mrf.mxu0
    %v710 = vadd.f32 0.0, %v709
    %711 = vmatmul.bf16.gmra.mxu0 %v666
    %v712 = vpop.f32.mrf.mxu0
    %v713 = vadd.f32 0.0, %v712
    %v714 = vpop.f32.mrf.mxu0
    %715 = vdwg.mxu0
    %v716 = vmax.f32 %v680, 0.0
    %v717 = vmax.f32 %v703, 0.0
    %v718 = vmax.f32 %v682, 0.0
    %v719 = vmax.f32 %v705, 0.0
    %v720 = vmax.f32 %v685, 0.0
    %v721 = vmax.f32 %v708, 0.0
    %v722 = vmax.f32 %v687, 0.0
    %v723 = vmax.f32 %v710, 0.0
    %v724 = vmax.f32 %v690, 0.0
    %v725 = vmax.f32 %v713, 0.0
    %v726 = vld [vmem:[%s3] sm:$0xf]
    %v727 = vld [vmem:[%s3 + $0x4] sm:$0xf]
    %v728 = vld [vmem:[%s3 + $0x8] sm:$0xf]
    %v729 = vld [vmem:[%s3 + $0xc] sm:$0xf]
    %v730 = vld [vmem:[%s3 + $0x10] sm:$0xf]
    %v731 = vpack.c.bf16 %v718, %v716
    %v732 = vpack.c.bf16 %v719, %v717
    %v733 = vpack.c.bf16 %v722, %v720
    %v734 = vpack.c.bf16 %v723, %v721
    %v735 = vpack.c.bf16 %v724, %v724
    %v736 = vpack.c.bf16 %v725, %v725
    %v742 = vunpack.c.l.b16 %v726
    %v743 = vunpack.c.l.b16 %v727
    %v744 = vunpack.c.l.b16 %v728
    %v745 = vunpack.c.l.b16 %v729
    %v746 = vunpack.c.l.b16 %v730
    %v747 = vpack.c.b16 %v743, %v742
    %v748 = vpack.c.b16 %v745, %v744
    %v749 = vpack.c.b16 %v746, %v746
    %vm750 = vcmask 326656
    %v752 = vsel %vm750, %v747, 0
    %v755 = vsel %vm750, %v748, 0
    %v758 = vsel %vm750, %v749, 0
    %vm760 = vcmask 1043456
    %v762 = vsel %vm760, %v735, 0
    %v765 = vsel %vm760, %v736, 0
    %767 = vmatpush.bf16.msra.mxu0 0
    %768 = vmatpush.bf16.msra.mxu0 0
    %769 = vmatpush.bf16.msra.mxu0 0
    %770 = vmatpush.bf16.msra.mxu0 0
    %771 = vmatpush.bf16.msra.mxu0 0
    %772 = vmatpush.bf16.msra.mxu0 %v762
    %773 = vmatpush.bf16.msra.mxu0 %v733
    %774 = vmatpush.bf16.msra.mxu0 %v731
    %775 = vmatmul.bf16.gmra.mxu0 %v752
    %v776 = vpop.f32.mrf.mxu0
    %v777 = vadd.f32 0.0, %v776
    %v778 = vpop.f32.mrf.mxu0
    %v779 = vadd.f32 0.0, %v778
    %780 = vmatmul.bf16.gmra.mxu0 %v755
    %v781 = vpop.f32.mrf.mxu0
    %v782 = vadd.f32 0.0, %v781
    %v783 = vpop.f32.mrf.mxu0
    %v784 = vadd.f32 0.0, %v783
    %785 = vmatmul.bf16.gmra.mxu0 %v758
    %v786 = vpop.f32.mrf.mxu0
    %v787 = vadd.f32 0.0, %v786
    %v788 = vpop.f32.mrf.mxu0
    %789 = vdwg.mxu0
    %790 = vmatpush.bf16.msra.mxu0 0
    %791 = vmatpush.bf16.msra.mxu0 0
    %792 = vmatpush.bf16.msra.mxu0 0
    %793 = vmatpush.bf16.msra.mxu0 0
    %794 = vmatpush.bf16.msra.mxu0 0
    %795 = vmatpush.bf16.msra.mxu0 %v765
    %796 = vmatpush.bf16.msra.mxu0 %v734
    %797 = vmatpush.bf16.msra.mxu0 %v732
    %798 = vmatmul.bf16.gmra.mxu0 %v752
    %v799 = vpop.f32.mrf.mxu0
    %v800 = vadd.f32 0.0, %v799
    %v801 = vpop.f32.mrf.mxu0
    %v802 = vadd.f32 0.0, %v801
    %803 = vmatmul.bf16.gmra.mxu0 %v755
    %v804 = vpop.f32.mrf.mxu0
    %v805 = vadd.f32 0.0, %v804
    %v806 = vpop.f32.mrf.mxu0
    %v807 = vadd.f32 0.0, %v806
    %808 = vmatmul.bf16.gmra.mxu0 %v758
    %v809 = vpop.f32.mrf.mxu0
    %v810 = vadd.f32 0.0, %v809
    %v811 = vpop.f32.mrf.mxu0
    %812 = vdwg.mxu0
    %v813 = vmax.f32 %v777, 0.0
    %v814 = vmax.f32 %v800, 0.0
    %v815 = vmax.f32 %v779, 0.0
    %v816 = vmax.f32 %v802, 0.0
    %v817 = vmax.f32 %v782, 0.0
    %v818 = vmax.f32 %v805, 0.0
    %v819 = vmax.f32 %v784, 0.0
    %v820 = vmax.f32 %v807, 0.0
    %v821 = vmax.f32 %v787, 0.0
    %v822 = vmax.f32 %v810, 0.0
    %v823 = vld [vmem:[%s4] sm:$0xff]
    %v824 = vld [vmem:[%s4 + $0x8] sm:$0xff]
    %v825 = vld [vmem:[%s4 + $0x10] sm:$0xff]
    %v826 = vld [vmem:[%s4 + $0x18] sm:$0xff]
    %v827 = vld [vmem:[%s4 + $0x20] sm:$0xff]
    %829 = vset.pattern.permute.xlu0 0
    %830 = vperm.xlu0 %829, %v823
    %v831 = vpop.permute.xlu0 %830
    %834 = vset.pattern.permute.xlu0 0
    %835 = vperm.xlu0 %834, %v824
    %v836 = vpop.permute.xlu0 %835
    %839 = vset.pattern.permute.xlu0 0
    %840 = vperm.xlu0 %839, %v825
    %v841 = vpop.permute.xlu0 %840
    %844 = vset.pattern.permute.xlu0 0
    %845 = vperm.xlu0 %844, %v826
    %v846 = vpop.permute.xlu0 %845
    %849 = vset.pattern.permute.xlu0 0
    %850 = vperm.xlu0 %849, %v827
    %v851 = vpop.permute.xlu0 %850
    %v853 = vmul.f32 %v831, %v813
    %v854 = vmul.f32 %v831, %v814
    %v855 = vmul.f32 %v836, %v815
    %v856 = vmul.f32 %v836, %v816
    %v857 = vmul.f32 %v841, %v817
    %v858 = vmul.f32 %v841, %v818
    %v859 = vmul.f32 %v846, %v819
    %v860 = vmul.f32 %v846, %v820
    %v861 = vmul.f32 %v851, %v821
    %v862 = vmul.f32 %v851, %v822
    %v863 = vadd.f32 %v853, %v855
    %v864 = vadd.f32 %v863, %v857
    %v865 = vadd.f32 %v864, %v859
    %v866 = vadd.f32 %v865, %v861
    %v867 = vrot.slane %v866, 4
    %v868 = vadd.f32 %v866, %v867
    %v869 = vrot.slane %v868, 2
    %v870 = vadd.f32 %v868, %v869
    %v871 = vrot.slane %v870, 1
    %v872 = vadd.f32 %v870, %v871
    %v873 = vadd.f32 %v854, %v856
    %v874 = vadd.f32 %v873, %v858
    %v875 = vadd.f32 %v874, %v860
    %v876 = vadd.f32 %v875, %v862
    %v877 = vrot.slane %v876, 4
    %v878 = vadd.f32 %v876, %v877
    %v879 = vrot.slane %v878, 2
    %v880 = vadd.f32 %v878, %v879
    %v881 = vrot.slane %v880, 1
    %v882 = vadd.f32 %v880, %v881
    %v885 = vrot.slane %v882, 7
    %vm886 = vcmask 1040384
    %v887 = vsel %vm886, %v872, %v885
    %v889 = vlaneseq
    %vm890 = vcmp.ge.s32.totalorder %v889, 0
    %vm891 = vcmp.lt.s32.totalorder %v889, 256
    %vm892 = vmand %vm890, %vm891
    %893 = vst.msk [vmem:[#allocation2] sm:$0x3] %vm892, %v887
    // Predicated region
    $region22: #{text_and_graph_and_num_forward.1} parent=1 // pred_check
      _
    $region23: #{text_and_graph_and_num_forward.1} parent=1 // pred_check_branch
      %895 = sbr.rel (0) target = $region25
    $region24: #{text_and_graph_and_num_forward.1} parent=1 // pred_region
      %897 = vsyncadd [#allocation3], 0
      %s899 = sshll.u32 [#allocation2], 4
      %s900 = int_to_ptr.vmem [resolvable:$true] %s899
      %s901 = sshll.u32 %s5, 4
      %s902 = int_to_ptr.hbm [resolvable:$true] %s901
      %904 = dma.vmem_to_hbm [thread:$0]  %s900, 32, %s902, [#allocation3]
    $region25: #{text_and_graph_and_num_forward.1} parent=1 // pred_fallthru
      _
    // Predicated region
    $region26: #{text_and_graph_and_num_forward.1} parent=1 // pred_check
      _
    $region27: #{text_and_graph_and_num_forward.1} parent=1 // pred_check_branch
      %906 = sbr.rel (0) target = $region29
    $region28: #{text_and_graph_and_num_forward.1} parent=1 // pred_region
      %908 = dma.done [#allocation3], 32
    $region29: #{text_and_graph_and_num_forward.1} parent=1 // pred_fallthru
      _
    %909 = vsyncpa [#allocation3], 1

</llo_original>
